<compile_context>
chip_gen: v7x
topology: tpu7x:2x2x1
jax: 0.10.0
libtpu: 0.0.40
codegen_flags: <defaults>
</compile_context>

<pallas_src>
import math
import jax
import jax.numpy as jnp
from jax import lax
from jax.experimental import pallas as pl
from jax.experimental.pallas import tpu as pltpu


def _gather_l2norm_kernel(pos_ref, table_ref, out_ref):
    # pos_ref   : SMEM (n_pad,) int32   -- scalar-prefetched, clamped positions
    # table_ref : VMEM (n_ctx, n_state) -- full embedding table, resident
    # out_ref   : VMEM (TQ, n_state)    -- output tile for this grid step
    tq = out_ref.shape[0]
    base = pl.program_id(0) * tq

    def gather_row(r, carry):
        p = pos_ref[base + r]
        out_ref[r, :] = table_ref[p, :]
        return carry

    lax.fori_loop(0, tq, gather_row, 0)

    x = out_ref[...].astype(jnp.float32)
    sq = jnp.sum(x * x, axis=-1, keepdims=True)
    # max(||x||, 1e-12) == sqrt(max(||x||^2, 1e-24)); rsqrt runs on the EUP.
    inv = lax.rsqrt(jnp.maximum(sq, 1e-24))
    out_ref[...] = (x * inv).astype(out_ref.dtype)


def learned_sinusoidal_embeddings(positions, emb_table, *, rows_per_step=256):
    """positions: int array of any shape; emb_table: (n_ctx, n_state) f32."""
    n_ctx, n_state = emb_table.shape
    pos_flat = positions.reshape(-1).astype(jnp.int32)
    # Clamp: OOB gathers on TPU are silent / fault, never checked at runtime.
    pos_flat = jnp.clip(pos_flat, 0, n_ctx - 1)
    n = pos_flat.shape[0]

    # Rows per grid step: multiple of 8 (f32 sublane), capped at rows_per_step.
    tq = min(rows_per_step, max(8, -(-n // 8) * 8))
    n_pad = pl.cdiv(n, tq) * tq
    pos_padded = jnp.pad(pos_flat, (0, n_pad - n))  # padded rows gather row 0

    # VMEM budget: resident table + double-buffered output tiles (+ margin).
    itemsize = jnp.dtype(emb_table.dtype).itemsize
    needed = n_ctx * n_state * itemsize + 4 * tq * n_state * itemsize + (1 << 20)
    # TODO(synk): for tables larger than ~40 MiB, fall back to batched manual
    #             HBM-row DMA gather (memory_space=pl.ANY + make_async_copy).
    vmem_limit = min(max(needed, 16 * 1024 * 1024), 64 * 1024 * 1024)

    out_flat = pl.pallas_call(
        _gather_l2norm_kernel,
        out_shape=jax.ShapeDtypeStruct((n_pad, n_state), emb_table.dtype),
        grid_spec=pltpu.PrefetchScalarGridSpec(
            num_scalar_prefetch=1,
            grid=(n_pad // tq,),
            in_specs=[
                # Constant block index -> table DMA'd once, stays resident.
                pl.BlockSpec((n_ctx, n_state), lambda i, pos: (0, 0)),
            ],
            out_specs=pl.BlockSpec((tq, n_state), lambda i, pos: (i, 0)),
        ),
        compiler_params=pltpu.CompilerParams(
            dimension_semantics=("parallel",),
            vmem_limit_bytes=vmem_limit,
        ),
    )(pos_padded, emb_table)

    return out_flat[:n].reshape(positions.shape + (n_state,))


def make_sinusoidal_table(n_ctx, n_state):
    """Deterministic init matching the PyTorch __init__."""
    position = jnp.arange(0, n_ctx, dtype=jnp.float32)[:, None]          # (n_ctx, 1)
    div_term = jnp.exp(
        jnp.arange(0, n_state, 2, dtype=jnp.float32) * -(math.log(10000.0) / n_state)
    )                                                                    # (n_state//2,)
    feats = jnp.zeros((n_ctx, n_state), dtype=jnp.float32)
    feats = feats.at[:, 0::2].set(jnp.sin(position * div_term))
    feats = feats.at[:, 1::2].set(jnp.cos(position * div_term))
    return feats


def _reference(positions, emb_table):
    e = emb_table[positions]
    norm = jnp.sqrt(jnp.sum(e * e, axis=-1, keepdims=True))
    return e / jnp.maximum(norm, 1e-12)


if __name__ == "__main__":
    n_ctx, n_state = 64, 32
    batch, seq = 2, 8

    # Deterministic "parameter": positional_embeddings initialized to the
    # sinusoidal features (exactly what nn.Parameter(features.clone()) gives).
    emb_table = make_sinusoidal_table(n_ctx, n_state)

    key = jax.random.PRNGKey(0)
    positions = jax.random.randint(key, (batch, seq), 0, n_ctx, dtype=jnp.int32)

    out = learned_sinusoidal_embeddings(positions, emb_table)
    out = jax.block_until_ready(out)

    ref = _reference(positions, emb_table)
    assert out.shape == (batch, seq, n_state)
    assert jnp.allclose(out, ref, atol=1e-5, rtol=1e-5)

    print("KERNEL_OK")
</pallas_src>

<mosaic_0001>
module attributes {stable_mosaic.version = 11 : i64} {
  func.func @_gather_l2norm_kernel(%arg0: i32, %arg1: memref<16xi32, #tpu.memory_space<smem>>, %arg2: memref<64x32xf32, #tpu.memory_space<vmem>>, %arg3: memref<16x32xf32, #tpu.memory_space<vmem>>) attributes {dimension_semantics = [#tpu.dimension_semantics<parallel>], iteration_bounds = array<i64: 1>, scalar_prefetch = 1 : i64, scratch_operands = 0 : i64, tpu.core_type = #tpu.core_type<tc>, window_params = [{pipeline_mode = #tpu.pipeline_mode<synchronous>, transform_indices = @transform_0, window_bounds = array<i64: 64, 32>}, {transform_indices = @transform_1, window_bounds = array<i64: 16, 32>}]} {
    %c16_i32 = arith.constant 16 : i32
    %0 = arith.muli %arg0, %c16_i32 : i32
    %c0_i32 = arith.constant 0 : i32
    %c16_i32_0 = arith.constant 16 : i32
    %1 = arith.addi %c0_i32, %c16_i32_0 : i32
    %c1_i32 = arith.constant 1 : i32
    scf.for %arg4 = %c0_i32 to %1 step %c1_i32  : i32 {
      %12 = arith.addi %0, %arg4 : i32
      %13 = arith.index_cast %12 : i32 to index
      %14 = memref.load %arg1[%13] : memref<16xi32, #tpu.memory_space<smem>>
      %15 = arith.index_cast %14 : i32 to index
      %c0_6 = arith.constant 0 : index
      %16 = vector.load %arg2[%15, %c0_6] : memref<64x32xf32, #tpu.memory_space<vmem>>, vector<1x32xf32>
      %17 = vector.shape_cast %16 : vector<1x32xf32> to vector<32xf32>
      %18 = arith.index_cast %arg4 : i32 to index
      %c0_7 = arith.constant 0 : index
      %19 = vector.load %arg3[%18, %c0_7] : memref<16x32xf32, #tpu.memory_space<vmem>>, vector<1x32xf32>
      %20 = vector.shape_cast %19 : vector<1x32xf32> to vector<32xf32>
      %21 = vector.shape_cast %17 : vector<32xf32> to vector<1x32xf32>
      tpu.vector_store %arg3[%18, %c0_7], %21 {strides = array<i32>} : memref<16x32xf32, #tpu.memory_space<vmem>>, vector<1x32xf32>,
    }
    %c16_i32_1 = arith.constant 16 : i32
    %c0 = arith.constant 0 : index
    %c0_2 = arith.constant 0 : index
    %2 = vector.load %arg3[%c0, %c0_2] : memref<16x32xf32, #tpu.memory_space<vmem>>, vector<16x32xf32>
    %3 = arith.mulf %2, %2 : vector<16x32xf32>
    %cst = arith.constant dense<0.000000e+00> : vector<16xf32>
    %4 = vector.multi_reduction <add>, %3, %cst [1] : vector<16x32xf32> to vector<16xf32>
    %5 = vector.shape_cast %4 : vector<16xf32> to vector<16x1xf32>
    %cst_3 = arith.constant 1.000000e-24 : f32
    %6 = vector.broadcast %cst_3 : f32 to vector<16x1xf32>
    %7 = arith.maximumf %5, %6 : vector<16x1xf32>
    %8 = math.rsqrt %7 : vector<16x1xf32>
    %9 = vector.broadcast %8 : vector<16x1xf32> to vector<16x32xf32>
    %10 = arith.mulf %2, %9 : vector<16x32xf32>
    %c0_4 = arith.constant 0 : index
    %c0_5 = arith.constant 0 : index
    %11 = vector.load %arg3[%c0_4, %c0_5] : memref<16x32xf32, #tpu.memory_space<vmem>>, vector<16x32xf32>
    tpu.vector_store %arg3[%c0_4, %c0_5], %10 {strides = array<i32>} : memref<16x32xf32, #tpu.memory_space<vmem>>, vector<16x32xf32>,
    return
  }
  func.func @transform_0(%arg0: i32, %arg1: memref<16xi32, #tpu.memory_space<smem>>) -> (i32, i32) {
    %c0_i32 = arith.constant 0 : i32
    %c0_i32_0 = arith.constant 0 : i32
    %c0_i32_1 = arith.constant 0 : i32
    return %c0_i32, %c0_i32_0 : i32, i32
  }
  func.func @transform_1(%arg0: i32, %arg1: memref<16xi32, #tpu.memory_space<smem>>) -> (i32, i32) {
    %c0_i32 = arith.constant 0 : i32
    %c0_i32_0 = arith.constant 0 : i32
    return %arg0, %c0_i32 : i32, i32
  }
}

</mosaic_0001>

<llo_original>
// kernel: tpu_custom_call.1
$region0: #{tpu_custom_call.1}
  #allocation0 [shape = 'u32[]', space=smem, size = 0x4, offset = 0x4, fixed_abs, tag = 'smem constant byte address 0x4 - core index']
  #allocation1 [shape = 'u32[144,128]{1,0:T(1,128)}', space=vmem, size = 0x12000, scoped, tag = 'internal scratch']
  #allocation2 [shape = 's32[1]{0}', space=sflag, size = 0x4, scoped, tag = 'scoped memory for tpu_custom_call.1']
  #allocation3 [shape = 'u8[512]{0}', space=smem, size = 0x200, scoped, tag = 'prefetched SMEM operand 0']
  %s0 = inlined_call_operand.vmem [shape: s32[16], index: 0, kind: input, shape index: {}]
  %s1 = inlined_call_operand.vmem [shape: f32[64,32], index: 1, kind: input, shape index: {}]
  %s2 = inlined_call_operand.hbm [shape: f32[16,32], index: 2, kind: output, shape index: {}]
  %s3 = sld [smem:[#allocation0]]
  $region21: #{tpu_custom_call.1} parent=0
    _
  %s5 = ssub.s32 1, %s3
  %s6 = scalar_select 0, %s5, %s3
  %s7 = sshll.u32 %s0, 4
  %s8 = int_to_ptr.vmem [resolvable:$true] %s7
  %10 = dma.vmem_to_smem %s8, 16, [#allocation3], [#allocation2]
  %11 = dma.done [#allocation2], 16
  %12 = sfence
  $region1: #{tpu_custom_call.1} parent=0
    #allocation4 [shape = 'u8[8192]{0}', space=vmem, size = 0x2000, scoped, tag = 'output window, operand 0, single buffered']
    #allocation5 [shape = 's32[1]{0}', space=sflag, size = 0x4, scoped, tag = 'scoped memory for tpu_custom_call.1']
    %13 = vsyncpa [#allocation5], 0
    // Predicated region
    $region2: #{tpu_custom_call.1} parent=1 // pred_check
      _
    $region3: #{tpu_custom_call.1} parent=1 // pred_check_branch
      %15 = sbr.rel (0) target = $region5
    $region4: #{tpu_custom_call.1} parent=1 // pred_region
      _
    $region5: #{tpu_custom_call.1} parent=1 // pred_fallthru
      _
    %s16 = smul.u32 0, 16
    loop: start=0, step=1, limit=16
    $region6: #{tpu_custom_call.1} parent=1 // loop_pre_header
      _
    $region7: #{tpu_custom_call.1} parent=1 // loop_header
      %s18 = sphi 0, %s22
      %p19 = scmp.ge.s32.totalorder %s18, 16
    $region8: #{tpu_custom_call.1} parent=1 // loop_header_branch
      %21 = sbr.rel (%p19) target = $region12
    $region9: #{tpu_custom_call.1} parent=1 // loop_body
      %s23 = sadd.s32 %s16, %s18
      %s24 = sld [smem:[#allocation3 + %s23]]
      %s25 = scalar_lea.vmem %s1, %s24
      %v26 = vld [vmem:[%s25] sm:$0x1]
      %s27 = scalar_lea.vmem [#allocation4], %s18
      %vm28 = vcmask 253952
      %29 = vst.msk [vmem:[%s27] sm:$0x1] %vm28, %v26
    $region10: #{tpu_custom_call.1} parent=1 // loop_footer
      %s22 = sadd.s32 1, %s18
    $region11: #{tpu_custom_call.1} parent=1 // loop_footer_branch
      %17 = sbr.rel target = $region7
    $region12: #{tpu_custom_call.1} parent=1 // loop_exit
      _
    %v30 = vld [vmem:[#allocation4] sm:$0xff]
    %v31 = vld [vmem:[#allocation4 + $0x8] sm:$0xff]
    %v32 = vmul.f32 %v30, %v30
    %v33 = vmul.f32 %v31, %v31
    %vm34 = vcmask 261120
    %v35 = vsel %vm34, %v32, 0.0
    %36 = vadd.xlane.f32.xlu0 %v35
    %v37 = vpop.xlane.xlu0 %36
    %v38 = vsel %vm34, %v33, 0.0
    %39 = vadd.xlane.f32.xlu0 %v38
    %v40 = vpop.xlane.xlu0 %39
    %v41 = vmax.f32 %v37, 1e-24
    %v42 = vmax.f32 %v40, 1e-24
    %v43 = vrsqrt.pop %v41
    %v44 = vrsqrt.pop %v42
    %v45 = vmul.f32 %v30, %v43
    %v46 = vmul.f32 %v31, %v44
    %47 = vst.msk [vmem:[#allocation4] sm:$0xff] %vm34, %v45
    %48 = vst.msk [vmem:[#allocation4 + $0x8] sm:$0xff] %vm34, %v46
    // Predicated region
    $region13: #{tpu_custom_call.1} parent=1 // pred_check
      _
    $region14: #{tpu_custom_call.1} parent=1 // pred_check_branch
      %50 = sbr.rel (0) target = $region16
    $region15: #{tpu_custom_call.1} parent=1 // pred_region
      %s52 = ssub.s32 256, 256
      %53 = vsyncadd [#allocation5], %s52
      %s54 = sshll.u32 [#allocation4], 4
      %s55 = int_to_ptr.vmem [resolvable:$true] %s54
      %60 = dma.vmem_to_hbm [thread:$0]  %s55, 256, %s2, [#allocation5], 128, 128, 8
    $region16: #{tpu_custom_call.1} parent=1 // pred_fallthru
      _
    // Predicated region
    $region17: #{tpu_custom_call.1} parent=1 // pred_check
      _
    $region18: #{tpu_custom_call.1} parent=1 // pred_check_branch
      %62 = sbr.rel (0) target = $region20
    $region19: #{tpu_custom_call.1} parent=1 // pred_region
      %63 = dma.done [#allocation5], 256
    $region20: #{tpu_custom_call.1} parent=1 // pred_fallthru
      _
    %64 = vsyncpa [#allocation5], 1

</llo_original>
